<compile_context>
chip_gen: v6e
topology: v6e:2x2x1
jax: 0.10.0
libtpu: 0.0.40
codegen_flags: <defaults>
</compile_context>

<pallas_src>
import jax
import jax.numpy as jnp
from jax.experimental import pallas as pl
from jax.experimental.pallas import tpu as pltpu

YES_IDX = 3582   # token id for "Yes" (hardcoded in the PyTorch module)
NO_IDX = 1217    # token id for "No"


def _cross_score_kernel(h_ref, w_ref, score_ref):
    """Fused 2-column lm-head matmul + yes/no soft score (single K step).

    h_ref    : (bm, H) bf16  row-tile of last-token hidden states
    w_ref    : (H, 2)  bf16  gathered [yes, no] lm_head columns (resident)
    score_ref: (bm, 1) f32   score per sequence
    """
    logits = jnp.dot(
        h_ref[...], w_ref[...], preferred_element_type=jnp.float32
    )                                                     # (bm, 2), f32 accum
    # Model runs in bf16; the selected logits are then cast to f32
    # (`.float()` in the reference). Round-trip only the 2 logits we use.
    logits = logits.astype(jnp.bfloat16).astype(jnp.float32)
    yes = logits[:, 0:1]
    no = logits[:, 1:2]
    # exp(yes)/(exp(yes)+exp(no)) == 1/(1+exp(no-yes)) — stable, single exp.
    score_ref[...] = 1.0 / (1.0 + jnp.exp(no - yes))


def prepare_yes_no_weight(lm_head_w_vh):
    """Once-per-model gather of the two consumed lm_head rows (hoisted/cached).

    lm_head_w_vh: (V, H) — nn.Linear weight layout (out_features, in_features),
    so the "Yes"/"No" weights are two contiguous H-length rows (dense reads,
    not a stride-V column walk).  Returns an (H, 2) slab in the weight dtype.
    """
    V, H = lm_head_w_vh.shape
    assert YES_IDX < V and NO_IDX < V, (
        f"vocab size {V} too small for yes/no token ids {YES_IDX}/{NO_IDX}"
    )
    return jnp.stack([lm_head_w_vh[YES_IDX], lm_head_w_vh[NO_IDX]], axis=1)


def cross_score(last_hidden, w_yes_no):
    """last_hidden: (B, H) bf16, w_yes_no: (H, 2) bf16 -> scores (B,) f32."""
    B, H = last_hidden.shape
    H2, two = w_yes_no.shape
    assert H == H2 and two == 2

    # Single block at small B; for big batches shard 256-row tiles across
    # TensorCores (v7x megacore) via a "parallel" grid axis.
    bm = 256 if (B % 256 == 0) else B
    grid_b = B // bm

    flops = 2 * B * H * 2                     # the (B,H)@(H,2) matmul
    bytes_accessed = (
        B * H * last_hidden.dtype.itemsize    # hidden states
        + H * 2 * w_yes_no.dtype.itemsize     # yes/no weight slab
        + B * 4                               # f32 scores out
    )

    scores = pl.pallas_call(
        _cross_score_kernel,
        out_shape=jax.ShapeDtypeStruct((B, 1), jnp.float32),
        grid_spec=pltpu.PrefetchScalarGridSpec(
            num_scalar_prefetch=0,
            grid=(grid_b,),
            in_specs=[
                pl.BlockSpec((bm, H), lambda i: (i, 0)),   # hidden-state rows
                pl.BlockSpec((H, 2), lambda i: (0, 0)),    # resident yes/no cols
            ],
            out_specs=pl.BlockSpec((bm, 1), lambda i: (i, 0)),
        ),
        compiler_params=pltpu.CompilerParams(
            dimension_semantics=("parallel",),
        ),
        cost_estimate=pl.CostEstimate(
            flops=flops, transcendentals=B, bytes_accessed=bytes_accessed
        ),
    )(last_hidden, w_yes_no)
    return scores[:, 0]


def cross_score_llava_forward(last_hidden, w_yes_no, num_captions, num_sequences):
    """mode='gen' forward: scores reshaped to (num_captions, num_sequences)."""
    scores = cross_score(last_hidden, w_yes_no)
    assert scores.size == num_captions * num_sequences, "Output size mismatch"
    return scores.reshape(num_captions, num_sequences)


def _reference(last_hidden, lm_head_w_vh, num_captions, num_sequences):
    logits = jnp.dot(
        last_hidden, lm_head_w_vh.T, preferred_element_type=jnp.float32
    ).astype(jnp.bfloat16).astype(jnp.float32)
    yes = logits[:, YES_IDX]
    no = logits[:, NO_IDX]
    ey, en = jnp.exp(yes), jnp.exp(no)
    return (ey / (ey + en)).reshape(num_captions, num_sequences)


if __name__ == "__main__":
    # Small, forward-consistent shapes: 2 captions x 4 generated sequences,
    # hidden size 256, vocab 4096 (big enough to contain yes_idx=3582).
    num_captions, num_sequences = 2, 4
    B = num_captions * num_sequences
    H, V = 256, 4096

    key = jax.random.PRNGKey(0)
    k_h, k_w = jax.random.split(key)
    # Synthetic last-token hidden states of the (not reproduced) LLaVA stack.
    last_hidden = (
        jax.random.normal(k_h, (B, H), dtype=jnp.float32) * 0.1
    ).astype(jnp.bfloat16)
    # lm_head weight in nn.Linear layout: (V, H) = (out_features, in_features).
    lm_head_w_vh = (
        jax.random.normal(k_w, (V, H), dtype=jnp.float32) * 0.05
    ).astype(jnp.bfloat16)

    # Hoisted once-per-model weight prep (cached at model load in practice,
    # not on the per-call scoring path).
    w_yes_no = jax.block_until_ready(prepare_yes_no_weight(lm_head_w_vh))

    out = cross_score_llava_forward(
        last_hidden, w_yes_no, num_captions, num_sequences
    )
    out = jax.block_until_ready(out)

    ref = _reference(last_hidden, lm_head_w_vh, num_captions, num_sequences)
    assert out.shape == (num_captions, num_sequences)
    assert jnp.allclose(out, ref, atol=1e-3, rtol=1e-3), (out, ref)
    print("KERNEL_OK")
</pallas_src>

<mosaic_0001>
module attributes {stable_mosaic.version = 11 : i64} {
  func.func @_cross_score_kernel(%arg0: i32, %arg1: memref<8x256xbf16, #tpu.memory_space<vmem>>, %arg2: memref<256x2xbf16, #tpu.memory_space<vmem>>, %arg3: memref<8x1xf32, #tpu.memory_space<vmem>>) attributes {dimension_semantics = [#tpu.dimension_semantics<parallel>], iteration_bounds = array<i64: 1>, scalar_prefetch = 0 : i64, scratch_operands = 0 : i64, tpu.core_type = #tpu.core_type<tc>, window_params = [{transform_indices = @transform_0, window_bounds = array<i64: 8, 256>}, {pipeline_mode = #tpu.pipeline_mode<synchronous>, transform_indices = @transform_1, window_bounds = array<i64: 256, 2>}, {transform_indices = @transform_2, window_bounds = array<i64: 8, 1>}]} {
    %c0 = arith.constant 0 : index
    %c0_0 = arith.constant 0 : index
    %0 = vector.load %arg1[%c0, %c0_0] : memref<8x256xbf16, #tpu.memory_space<vmem>>, vector<8x256xbf16>
    %c0_1 = arith.constant 0 : index
    %c0_2 = arith.constant 0 : index
    %1 = vector.load %arg2[%c0_1, %c0_2] : memref<256x2xbf16, #tpu.memory_space<vmem>>, vector<256x2xbf16>
    %cst = arith.constant dense<0.000000e+00> : vector<8x2xf32>
    %2 = tpu.matmul %0, %1, %cst {dimension_numbers = #tpu.dot_dimension_numbers<[1], [0], [0], [1], [0, 0, 1, 1], [], []>} : vector<8x256xbf16>, vector<256x2xbf16>, vector<8x2xf32> -> vector<8x2xf32>
    %3 = arith.truncf %2 : vector<8x2xf32> to vector<8x2xbf16>
    %4 = arith.extf %3 : vector<8x2xbf16> to vector<8x2xf32>
    %5 = vector.extract_strided_slice %4 {offsets = [0, 0], sizes = [8, 1], strides = [1, 1]} : vector<8x2xf32> to vector<8x1xf32>
    %6 = vector.extract_strided_slice %4 {offsets = [0, 1], sizes = [8, 1], strides = [1, 1]} : vector<8x2xf32> to vector<8x1xf32>
    %7 = arith.subf %6, %5 : vector<8x1xf32>
    %8 = math.exp %7 : vector<8x1xf32>
    %cst_3 = arith.constant 1.000000e+00 : f32
    %9 = vector.broadcast %cst_3 : f32 to vector<8x1xf32>
    %10 = arith.addf %9, %8 : vector<8x1xf32>
    %cst_4 = arith.constant 1.000000e+00 : f32
    %11 = vector.broadcast %cst_4 : f32 to vector<8x1xf32>
    %12 = arith.divf %11, %10 : vector<8x1xf32>
    %c0_5 = arith.constant 0 : index
    %c0_6 = arith.constant 0 : index
    %13 = vector.load %arg3[%c0_5, %c0_6] : memref<8x1xf32, #tpu.memory_space<vmem>>, vector<8x1xf32>
    tpu.vector_store %arg3[%c0_5, %c0_6], %12 {strides = array<i32>} : memref<8x1xf32, #tpu.memory_space<vmem>>, vector<8x1xf32>,
    return
  }
  func.func @transform_0(%arg0: i32) -> (i32, i32) {
    %c0_i32 = arith.constant 0 : i32
    %c0_i32_0 = arith.constant 0 : i32
    return %arg0, %c0_i32 : i32, i32
  }
  func.func @transform_1(%arg0: i32) -> (i32, i32) {
    %c0_i32 = arith.constant 0 : i32
    %c0_i32_0 = arith.constant 0 : i32
    %c0_i32_1 = arith.constant 0 : i32
    return %c0_i32, %c0_i32_0 : i32, i32
  }
  func.func @transform_2(%arg0: i32) -> (i32, i32) {
    %c0_i32 = arith.constant 0 : i32
    %c0_i32_0 = arith.constant 0 : i32
    return %arg0, %c0_i32 : i32, i32
  }
}

</mosaic_0001>

<llo_original>
// kernel: tpu_custom_call.1
$region0: #{tpu_custom_call.1}
  #allocation0 [shape = 'u32[]', space=smem, size = 0x4, offset = 0x4, fixed_abs, tag = 'smem constant byte address 0x4 - core index']
  #allocation1 [shape = 'u32[144,128]{1,0:T(1,128)}', space=vmem, size = 0x12000, scoped, tag = 'internal scratch']
  %s0 = inlined_call_operand.vmem [shape: bf16[8,256], index: 0, kind: input, shape index: {}]
  %s1 = inlined_call_operand.vmem [shape: bf16[256,2], index: 1, kind: input, shape index: {}]
  %s2 = inlined_call_operand.vmem [shape: f32[8,1], index: 2, kind: output, shape index: {}]
  %s3 = sld [smem:[#allocation0]]
  $region18: #{tpu_custom_call.1} parent=0
    _
  %s5 = ssub.s32 1, %s3
  %s6 = scalar_select 0, %s5, %s3
  // Predicated region
  $region2: #{tpu_custom_call.1} parent=0 // pred_check
    _
  $region3: #{tpu_custom_call.1} parent=0 // pred_check_branch
    %8 = sbr.rel (0) target = $region5
  $region4: #{tpu_custom_call.1} parent=0 // pred_region
    _
  $region5: #{tpu_custom_call.1} parent=0 // pred_fallthru
    _
  // Predicated region
  $region6: #{tpu_custom_call.1} parent=0 // pred_check
    _
  $region7: #{tpu_custom_call.1} parent=0 // pred_check_branch
    %10 = sbr.rel (0) target = $region9
  $region8: #{tpu_custom_call.1} parent=0 // pred_region
    _
  $region9: #{tpu_custom_call.1} parent=0 // pred_fallthru
    _
  %v12 = vld [vmem:[%s0] sm:$0xff]
  %v13 = vld [vmem:[%s1] sm:$0xf]
  %v14 = vld [vmem:[%s1 + $0x4] sm:$0xf]
  %v15 = vld [vmem:[%s1 + $0x8] sm:$0xf]
  %v16 = vld [vmem:[%s1 + $0xc] sm:$0xf]
  %v17 = vld [vmem:[%s1 + $0x10] sm:$0xf]
  %v18 = vld [vmem:[%s1 + $0x14] sm:$0xf]
  %v19 = vld [vmem:[%s1 + $0x18] sm:$0xf]
  %v20 = vld [vmem:[%s1 + $0x1c] sm:$0xf]
  %v21 = vld [vmem:[%s1 + $0x20] sm:$0xf]
  %v22 = vld [vmem:[%s1 + $0x24] sm:$0xf]
  %v23 = vld [vmem:[%s1 + $0x28] sm:$0xf]
  %v24 = vld [vmem:[%s1 + $0x2c] sm:$0xf]
  %v25 = vld [vmem:[%s1 + $0x30] sm:$0xf]
  %v26 = vld [vmem:[%s1 + $0x34] sm:$0xf]
  %v27 = vld [vmem:[%s1 + $0x38] sm:$0xf]
  %v28 = vld [vmem:[%s1 + $0x3c] sm:$0xf]
  %v29 = vld [vmem:[%s1 + $0x40] sm:$0xf]
  %v30 = vld [vmem:[%s1 + $0x44] sm:$0xf]
  %v31 = vld [vmem:[%s1 + $0x48] sm:$0xf]
  %v32 = vld [vmem:[%s1 + $0x4c] sm:$0xf]
  %v33 = vld [vmem:[%s1 + $0x50] sm:$0xf]
  %v34 = vld [vmem:[%s1 + $0x54] sm:$0xf]
  %v35 = vld [vmem:[%s1 + $0x58] sm:$0xf]
  %v36 = vld [vmem:[%s1 + $0x5c] sm:$0xf]
  %v37 = vld [vmem:[%s1 + $0x60] sm:$0xf]
  %v38 = vld [vmem:[%s1 + $0x64] sm:$0xf]
  %v39 = vld [vmem:[%s1 + $0x68] sm:$0xf]
  %v40 = vld [vmem:[%s1 + $0x6c] sm:$0xf]
  %v41 = vld [vmem:[%s1 + $0x70] sm:$0xf]
  %v42 = vld [vmem:[%s1 + $0x74] sm:$0xf]
  %v43 = vld [vmem:[%s1 + $0x78] sm:$0xf]
  %v44 = vld [vmem:[%s1 + $0x7c] sm:$0xf]
  %v46 = vunpack.c.l.b16 %v12
  %v47 = vunpack.c.h.b16 %v12
  %v48 = vpack.c.b16 %v46, %v46
  %v49 = vpack.c.b16 %v47, %v47
  %v84 = vunpack.c.l.b16 %v13
  %v85 = vunpack.c.l.b16 %v14
  %v86 = vunpack.c.l.b16 %v15
  %v87 = vunpack.c.l.b16 %v16
  %v88 = vunpack.c.l.b16 %v17
  %v89 = vunpack.c.l.b16 %v18
  %v90 = vunpack.c.l.b16 %v19
  %v91 = vunpack.c.l.b16 %v20
  %v92 = vunpack.c.l.b16 %v21
  %v93 = vunpack.c.l.b16 %v22
  %v94 = vunpack.c.l.b16 %v23
  %v95 = vunpack.c.l.b16 %v24
  %v96 = vunpack.c.l.b16 %v25
  %v97 = vunpack.c.l.b16 %v26
  %v98 = vunpack.c.l.b16 %v27
  %v99 = vunpack.c.l.b16 %v28
  %v100 = vunpack.c.l.b16 %v29
  %v101 = vunpack.c.l.b16 %v30
  %v102 = vunpack.c.l.b16 %v31
  %v103 = vunpack.c.l.b16 %v32
  %v104 = vunpack.c.l.b16 %v33
  %v105 = vunpack.c.l.b16 %v34
  %v106 = vunpack.c.l.b16 %v35
  %v107 = vunpack.c.l.b16 %v36
  %v108 = vunpack.c.l.b16 %v37
  %v109 = vunpack.c.l.b16 %v38
  %v110 = vunpack.c.l.b16 %v39
  %v111 = vunpack.c.l.b16 %v40
  %v112 = vunpack.c.l.b16 %v41
  %v113 = vunpack.c.l.b16 %v42
  %v114 = vunpack.c.l.b16 %v43
  %v115 = vunpack.c.l.b16 %v44
  %v116 = vpack.c.b16 %v85, %v84
  %v117 = vpack.c.b16 %v87, %v86
  %v118 = vpack.c.b16 %v89, %v88
  %v119 = vpack.c.b16 %v91, %v90
  %v120 = vpack.c.b16 %v93, %v92
  %v121 = vpack.c.b16 %v95, %v94
  %v122 = vpack.c.b16 %v97, %v96
  %v123 = vpack.c.b16 %v99, %v98
  %v124 = vpack.c.b16 %v101, %v100
  %v125 = vpack.c.b16 %v103, %v102
  %v126 = vpack.c.b16 %v105, %v104
  %v127 = vpack.c.b16 %v107, %v106
  %v128 = vpack.c.b16 %v109, %v108
  %v129 = vpack.c.b16 %v111, %v110
  %v130 = vpack.c.b16 %v113, %v112
  %v131 = vpack.c.b16 %v115, %v114
  %148 = vmatprep.subr.bf16.mxu0 0
  %149 = vmatpush1.bf16.msra.mxu0 %v123
  %150 = vmatprep.subr.bf16.mxu0 0
  %151 = vmatpush1.bf16.msra.mxu0 %v122
  %152 = vmatprep.subr.bf16.mxu0 0
  %153 = vmatpush1.bf16.msra.mxu0 %v121
  %154 = vmatprep.subr.bf16.mxu0 0
  %155 = vmatpush1.bf16.msra.mxu0 %v120
  %156 = vmatprep.subr.bf16.mxu0 0
  %157 = vmatpush1.bf16.msra.mxu0 %v119
  %158 = vmatprep.subr.bf16.mxu0 0
  %159 = vmatpush1.bf16.msra.mxu0 %v118
  %160 = vmatprep.subr.bf16.mxu0 0
  %161 = vmatpush1.bf16.msra.mxu0 %v117
  %162 = vmatprep.subr.bf16.mxu0 0
  %163 = vmatpush1.bf16.msra.mxu0 %v116
  %164 = vmatprep.subr.bf16.mxu0 0
  %165 = vmatpush2.bf16.msra.mxu0 %v131
  %166 = vmatprep.subr.bf16.mxu0 0
  %167 = vmatpush2.bf16.msra.mxu0 %v130
  %168 = vmatprep.subr.bf16.mxu0 0
  %169 = vmatpush2.bf16.msra.mxu0 %v129
  %170 = vmatprep.subr.bf16.mxu0 0
  %171 = vmatpush2.bf16.msra.mxu0 %v128
  %172 = vmatprep.subr.bf16.mxu0 0
  %173 = vmatpush2.bf16.msra.mxu0 %v127
  %174 = vmatprep.subr.bf16.mxu0 0
  %175 = vmatpush2.bf16.msra.mxu0 %v126
  %176 = vmatprep.subr.bf16.mxu0 0
  %177 = vmatpush2.bf16.msra.mxu0 %v125
  %178 = vmatprep.subr.bf16.mxu0 0
  %179 = vmatpush2.bf16.msra.mxu0 %v124
  %180 = vmatprep.mubr.bf16.mxu0 %v49
  %181 = vmatmul.mubr.bf16.gmra.mxu0 %v48
  %v182 = vpop.f32.mrf.mxu0
  %v183 = vadd.f32 0.0, %v182
  %v184 = vpop.f32.mrf.mxu0
  %v185 = vpop.f32.mrf.mxu0
  %v186 = vpop.f32.mrf.mxu0
  %187 = vdwg.mxu0
  %v188 = vpack.c.bf16 %v183, %v183
  %v189 = vunpack.c.l.bf16 %v188
  %191 = vrot.lane.b32.xlu0 %v189, 1
  %v192 = vpop.permute.xlu0 %191
  %v194 = vsub.f32 %v189, %v192
  %v195 = vmul.f32 %v194, 1.442695
  %v196 = vpow.pop %v195
  %v197 = vadd.f32 %v196, 1.0
  %v198 = vrcp.pop %v197
  %v199 = vmul.f32 1.0, %v198
  %201 = vrot.lane.b32.xlu0 %v199, 127
  %v202 = vpop.permute.xlu0 %201
  %vm204 = vcmask 7168
  %205 = vst.msk [vmem:[%s2] sm:$0xff] %vm204, %v202
  // Predicated region
  $region10: #{tpu_custom_call.1} parent=0 // pred_check
    _
  $region11: #{tpu_custom_call.1} parent=0 // pred_check_branch
    %207 = sbr.rel (0) target = $region13
  $region12: #{tpu_custom_call.1} parent=0 // pred_region
    _
  $region13: #{tpu_custom_call.1} parent=0 // pred_fallthru
    _
  // Predicated region
  $region14: #{tpu_custom_call.1} parent=0 // pred_check
    _
  $region15: #{tpu_custom_call.1} parent=0 // pred_check_branch
    %209 = sbr.rel (0) target = $region17
  $region16: #{tpu_custom_call.1} parent=0 // pred_region
    _
  $region17: #{tpu_custom_call.1} parent=0 // pred_fallthru
    _

</llo_original>
